<compile_context>
chip_gen: v5e
topology: v5e:2x2
jax: 0.10.0
libtpu: 0.0.40
codegen_flags: <defaults>
</compile_context>

<pallas_src>
import functools

import jax
import jax.numpy as jnp
import numpy as np
from jax import lax
from jax.experimental import pallas as pl
from jax.experimental.pallas import tpu as pltpu

# Per-timestep statistics produced by the kernel (columns 0..6 of the (T, 8)
# output; column 7 is lane padding and always zero):
#   0: tp        -- valid & pred==1 & target==1
#   1: pred_sum  -- valid & pred==1                 (fp = pred_sum - tp)
#   2: n_valid   -- valid (target != -1)
#   3: n_pos     -- valid & target==1               (fn = n_pos - tp)
#   4: abs_err   -- sum |output - target| over valid
#   5: sq_err    -- sum (output - target)^2 over valid
#   6: bce       -- sum -log(p_of_true_class) over valid (binary targets)
NUM_STATS = 7
STATS_PAD = 8

# TODO(synk): sklearn's log_loss uses its own eps / clamping convention; values
# can differ slightly at the probability extremes.
_BCE_EPS = 1e-7


def _round_up(x, m):
    return ((x + m - 1) // m) * m


def _round_down(x, m):
    return (x // m) * m


@functools.lru_cache(maxsize=None)
def _vmem_plan():
    """Returns (per-block f32 budget bytes, vmem_limit_bytes), per generation."""
    try:
        cap = int(pltpu.get_tpu_info().vmem_capacity_bytes)
    except Exception:
        cap = 64 * 1024 * 1024                       # conservative: v7x per-TC
    if cap >= 100 * 1024 * 1024:                     # v5e / v6e: 128 MiB VMEM
        return 4 * 1024 * 1024, 64 * 1024 * 1024
    return 2 * 1024 * 1024, 48 * 1024 * 1024         # v7x: 64 MiB VMEM


def _choose_tiling(T, n, budget_bytes):
    """Pick (tb, chunk_n): rows-per-block and pixel-chunk width.

    The f32 elementwise temporaries (~8 block-sized arrays) dominate the
    working set, so the budget is expressed in f32 elements per block.
    """
    budget_elems = max(budget_bytes // 4, 8 * 128)
    tb_min = T if T <= 8 else 8
    if tb_min * n <= budget_elems:
        # Whole (partial) rows fit in one block: no column chunking.
        chunk_n = n
        if T <= 8:
            tb = T
        else:
            tb_budget = _round_down(budget_elems // n, 8)     # >= 8 here
            # Force >= 2 T-blocks so v7x's two TensorCores both get work.
            tb_two = _round_up(pl.cdiv(T, 2), 8)
            tb = max(8, min(512, tb_budget, tb_two))
    else:
        # A single row block exceeds the budget: chunk the pixel axis.
        tb = tb_min
        chunk_n = max(128, _round_down(budget_elems // tb, 128))
        if chunk_n >= n:
            chunk_n = n
    return tb, chunk_n


def _metrics_kernel(o_ref, t_ref, stats_ref, *, threshold, n_total, chunk_n,
                    mask_cols, accumulate):
    """Masked per-timestep reductions over a (tb, chunk_n) block of pixels."""
    j = pl.program_id(1)                    # pixel-chunk (reduction) axis, last

    o = o_ref[...].astype(jnp.float32)      # (tb, chunk_n)
    t = t_ref[...].astype(jnp.float32)      # (tb, chunk_n)

    one = jnp.float32(1.0)
    zero = jnp.float32(0.0)

    valid = t != -1.0
    if mask_cols:
        # Last column chunk extends past n: out-of-range columns would mix
        # garbage into valid rows' sums, so mask them here.
        col = lax.broadcasted_iota(jnp.int32, (1, o.shape[1]), 1)
        valid = valid & ((col + j * chunk_n) < n_total)
    # NOTE: rows past T (partial last T-block) are intentionally NOT masked:
    # per-row sums never mix rows and Pallas clips the partial output-block
    # writeback, so garbage tail rows never reach the (T, 8) result.

    vf = jnp.where(valid, one, zero)
    pos = jnp.where(t > 0.5, vf, zero)          # target==1 (implies valid)
    pred_raw = jnp.where(o > threshold, one, zero)
    pred = pred_raw * vf                        # thresholded & valid (for fp)
    tp_term = pos * pred_raw                    # pos already excludes invalid

    diff = jnp.where(valid, o - t, zero)        # where-select is NaN/Inf safe
    oc = jnp.clip(o, _BCE_EPS, 1.0 - _BCE_EPS)
    # Binary targets (0/1 once -1 is masked) -> a single log per element.
    bce_term = jnp.where(valid, -jnp.log(jnp.where(t > 0.5, oc, one - oc)), zero)

    def rowsum(x):
        return jnp.sum(x, axis=1, keepdims=True)     # (tb, 1)

    block = jnp.concatenate(
        [rowsum(tp_term), rowsum(pred), rowsum(vf), rowsum(pos),
         rowsum(jnp.abs(diff)), rowsum(diff * diff), rowsum(bce_term),
         jnp.zeros((o.shape[0], 1), jnp.float32)],   # pad col 7 -> lane width 8
        axis=1)                                      # single (tb, 8) store

    if not accumulate:
        stats_ref[...] = block
    else:
        @pl.when(j == 0)
        def _():
            stats_ref[...] = block

        @pl.when(j != 0)
        def _():
            stats_ref[...] += block


@functools.partial(jax.jit, static_argnames=("threshold", "budget_bytes"))
def _per_scale_stats(output, target, threshold, budget_bytes=None):
    """output, target: (1, T, 1, H, W) -> (T, STATS_PAD) float32 stats."""
    B, T, C, H, W = output.shape
    n = H * W
    # Free reshapes (B == 1, C == 1): no padding, no extra HBM copies.  Inputs
    # keep their native dtype (bf16 / int8 welcome); the kernel upcasts in VMEM.
    o2 = output.reshape(T, n)
    t2 = target.reshape(T, n)

    auto_budget, vmem_limit = _vmem_plan()
    budget = auto_budget if budget_bytes is None else int(budget_bytes)
    tb, chunk_n = _choose_tiling(T, n, budget)

    num_tb = pl.cdiv(T, tb)
    num_cb = pl.cdiv(n, chunk_n)
    mask_cols = (chunk_n < n) and (n % chunk_n != 0)
    accumulate = num_cb > 1
    # TODO(synk): if profiling shows exposed DMA on v5e at this block size,
    # sweep pipeline_mode=pl.Buffered(3) on the two input BlockSpecs.

    kernel = functools.partial(
        _metrics_kernel, threshold=float(threshold), n_total=n,
        chunk_n=chunk_n, mask_cols=mask_cols, accumulate=accumulate)

    stats = pl.pallas_call(
        kernel,
        out_shape=jax.ShapeDtypeStruct((T, STATS_PAD), jnp.float32),
        grid_spec=pl.GridSpec(
            grid=(num_tb, num_cb),
            in_specs=[pl.BlockSpec((tb, chunk_n), lambda i, j: (i, j)),
                      pl.BlockSpec((tb, chunk_n), lambda i, j: (i, j))],
            out_specs=pl.BlockSpec((tb, STATS_PAD), lambda i, j: (i, 0)),
        ),
        compiler_params=pltpu.CompilerParams(
            dimension_semantics=("parallel", "arbitrary"),
            vmem_limit_bytes=vmem_limit),
    )(o2, t2)
    return stats


def _safe_div(a, b):
    return jnp.where(b > 0, a / jnp.where(b > 0, b, 1.0), 0.0)


@jax.jit
def _metrics_from_stats_batch(stats):
    """stats: (T, STATS_PAD) -> dict of (T,) metric arrays (NaN if undefined)."""
    tp = stats[:, 0]
    fp = stats[:, 1] - tp            # pred_sum - tp
    n_valid = stats[:, 2]
    n_pos = stats[:, 3]
    abs_err = stats[:, 4]
    sq_err = stats[:, 5]
    bce_sum = stats[:, 6]

    fn = n_pos - tp
    n_neg = n_valid - n_pos
    tn = n_neg - fp

    precision = _safe_div(tp, tp + fp)
    recall = _safe_div(tp, tp + fn)
    f1 = _safe_div(2.0 * precision * recall, precision + recall)
    accuracy = _safe_div(tp + tn, n_valid)
    fpr = _safe_div(fp, fp + tn)
    mse = _safe_div(sq_err, n_valid)
    mae = _safe_div(abs_err, n_valid)
    bce = _safe_div(bce_sum, n_valid)

    # Reference behavior: when only one class is present among valid pixels,
    # ALL metrics (including mse/mae/bce) are reported as NaN.
    defined = (n_pos > 0) & (n_neg > 0)
    nan = jnp.float32(jnp.nan)
    g = lambda x: jnp.where(defined, x, nan)
    return {
        "precision": g(precision), "recall": g(recall), "f1": g(f1),
        "accuracy": g(accuracy), "fpr": g(fpr),
        "mse": g(mse), "mae": g(mae), "bce": g(bce),
    }


class ScaleWiseEvaluationPallas:
    """JAX/Pallas re-implementation of ScaleWiseEvaluation.forward()."""

    def __init__(self, scales, config=None):
        self.scales = scales
        self.config = config
        self.precision_scores = {s: [] for s in scales}
        self.recall_scores = {s: [] for s in scales}
        self.f1_scores = {s: [] for s in scales}
        self.accuracy_scores = {s: [] for s in scales}
        self.mse_scores = {s: [] for s in scales}
        self.bce_scores = {s: [] for s in scales}
        self.fpr_scores = {s: [] for s in scales}
        self.mae_scores = {s: [] for s in scales}
        self.target_sample_dict = {}
        self.output_sample_dict = {}
        # TODO(synk): roc_auc / auc_pr / optimal PR threshold / ECE /
        # calibration curve need sorting & binning (sklearn-style); no clean
        # Pallas equivalent — not computed here.
        # TODO(synk): f32 sums lose integer precision once valid pixels per
        # timestep approach 2^24; column-chunked partial sums mitigate this,
        # but extremely large frames would need wider accumulators.

    def forward(self, outputs, targets, padding_masks, all_hash_chunk_indices,
                threshold=0.5, loss_calculation_scales=None,
                gt_probability_map=None, sample_index=None):
        if sample_index is None:
            raise ValueError("Sample index should be provided for visualization")
        loss_calculation_scales = (loss_calculation_scales
                                   if loss_calculation_scales else self.scales)
        optimal_threshold = {}
        for scale_idx, scale in enumerate(self.scales):
            if scale not in loss_calculation_scales:
                continue
            optimal_threshold[scale] = {"roc": [], "pr": []}
            output = outputs[scale_idx]
            target = targets[scale_idx]
            assert output.shape == target.shape
            assert output.shape[0] == 1, "Batch size should be 1"
            T = output.shape[1]

            # Hot path: 2-D Pallas grid (T blocks x pixel chunks).
            stats = _per_scale_stats(output, target, float(threshold))
            # One batched device->host transfer instead of T*8 float() syncs.
            m = jax.device_get(_metrics_from_stats_batch(stats))

            # Reference overwrites these per timestep; the surviving value is
            # the last timestep's squeezed (H, W) slice.
            self.target_sample_dict[sample_index] = np.asarray(
                jnp.squeeze(target[:, -1]))
            self.output_sample_dict[sample_index] = np.asarray(
                jnp.squeeze(output[:, -1]))

            for t in range(T):
                self.precision_scores[scale].append(float(m["precision"][t]))
                self.recall_scores[scale].append(float(m["recall"][t]))
                self.f1_scores[scale].append(float(m["f1"][t]))
                self.accuracy_scores[scale].append(float(m["accuracy"][t]))
                self.mse_scores[scale].append(float(m["mse"][t]))
                self.bce_scores[scale].append(float(m["bce"][t]))
                self.fpr_scores[scale].append(float(m["fpr"][t]))
                self.mae_scores[scale].append(float(m["mae"][t]))
                # Reference calculate_and_store_metrics returns (None, None).
                optimal_threshold[scale]["roc"].append(None)
                optimal_threshold[scale]["pr"].append(None)
        return optimal_threshold

    __call__ = forward


def _numpy_reference_stats(output, target, threshold):
    """Slow numpy reference for the 7 kernel statistics (sanity check)."""
    T = output.shape[1]
    o = np.asarray(output, dtype=np.float64).reshape(T, -1)
    t = np.asarray(target, dtype=np.float64).reshape(T, -1)
    out = np.zeros((T, NUM_STATS), np.float64)
    for i in range(T):
        msk = t[i] != -1
        ot, tt = o[i][msk], t[i][msk]
        pred = (ot > threshold).astype(np.float64)
        pos = (tt > 0.5).astype(np.float64)
        oc = np.clip(ot, _BCE_EPS, 1.0 - _BCE_EPS)
        bce = -np.log(np.where(tt > 0.5, oc, 1.0 - oc))
        out[i] = [np.sum(pred * pos), np.sum(pred), msk.sum(), pos.sum(),
                  np.abs(ot - tt).sum(), ((ot - tt) ** 2).sum(), bce.sum()]
    return out


def _make_pair(key, shape, ignore_frac=0.9, pos_frac=0.7):
    ko, kt, km = jax.random.split(key, 3)
    out = jax.random.uniform(ko, shape, dtype=jnp.float32)
    tgt = (jax.random.uniform(kt, shape) > pos_frac).astype(jnp.float32)
    ignore = jax.random.uniform(km, shape) > ignore_frac
    tgt = jnp.where(ignore, -1.0, tgt)
    return out, tgt


if __name__ == "__main__":
    key = jax.random.PRNGKey(0)
    k_scale1, k_scale2, k_big = jax.random.split(key, 3)

    B, T, C = 1, 4, 1
    scales = [1, 2]
    shapes = {1: (16, 16), 2: (8, 8)}

    outputs, targets = [], []
    for s, kk in zip(scales, (k_scale1, k_scale2)):
        H, W = shapes[s]
        out, tgt = _make_pair(kk, (B, T, C, H, W))
        outputs.append(out)
        targets.append(tgt)

    padding_masks = jnp.ones((B, T), dtype=jnp.float32)
    all_hash_chunk_indices = [("hash0", 0, 1)]

    evaluator = ScaleWiseEvaluationPallas(scales, config={})

    # 1) Single-block path (small scale): check kernel vs numpy reference.
    stats0 = _per_scale_stats(outputs[0], targets[0], 0.5)
    jax.block_until_ready(stats0)
    ref0 = _numpy_reference_stats(outputs[0], targets[0], 0.5)
    np.testing.assert_allclose(np.asarray(stats0)[:, :NUM_STATS], ref0,
                               rtol=2e-3, atol=1e-3)

    # 2) Column-chunk accumulation path with ragged T and ragged pixel tail:
    #    tiny budget forces chunking (tb=8, chunk_n=256 over n=400, T=12).
    o_big, t_big = _make_pair(k_big, (1, 12, 1, 20, 20))
    stats_big = _per_scale_stats(o_big, t_big, 0.5, budget_bytes=8 * 1024)
    jax.block_until_ready(stats_big)
    ref_big = _numpy_reference_stats(o_big, t_big, 0.5)
    np.testing.assert_allclose(np.asarray(stats_big)[:, :NUM_STATS], ref_big,
                               rtol=2e-3, atol=1e-3)

    # 3) Full forward-pass semantics of the module.
    result = evaluator.forward(
        outputs, targets, padding_masks, all_hash_chunk_indices,
        threshold=0.5, sample_index=0)

    # Touch results to make sure everything materialized.
    _ = result[1]["pr"], evaluator.precision_scores[1], evaluator.mse_scores[2]
    print("KERNEL_OK")
</pallas_src>

<mosaic_0001>
module attributes {stable_mosaic.version = 11 : i64} {
  func.func @_metrics_kernel(%arg0: i32, %arg1: i32, %arg2: memref<4x256xf32, #tpu.memory_space<vmem>>, %arg3: memref<4x256xf32, #tpu.memory_space<vmem>>, %arg4: memref<4x8xf32, #tpu.memory_space<vmem>>) attributes {dimension_semantics = [#tpu.dimension_semantics<parallel>, #tpu.dimension_semantics<arbitrary>], iteration_bounds = array<i64: 1, 1>, scalar_prefetch = 0 : i64, scratch_operands = 0 : i64, tpu.core_type = #tpu.core_type<tc>, window_params = [{transform_indices = @transform_0, window_bounds = array<i64: 4, 256>}, {transform_indices = @transform_1, window_bounds = array<i64: 4, 256>}, {transform_indices = @transform_2, window_bounds = array<i64: 4, 8>}]} {
    %c0 = arith.constant 0 : index
    %c0_0 = arith.constant 0 : index
    %0 = vector.load %arg2[%c0, %c0_0] : memref<4x256xf32, #tpu.memory_space<vmem>>, vector<4x256xf32>
    %c0_1 = arith.constant 0 : index
    %c0_2 = arith.constant 0 : index
    %1 = vector.load %arg3[%c0_1, %c0_2] : memref<4x256xf32, #tpu.memory_space<vmem>>, vector<4x256xf32>
    %cst = arith.constant -1.000000e+00 : f32
    %2 = vector.broadcast %cst : f32 to vector<4x256xf32>
    %3 = arith.cmpf one, %1, %2 : vector<4x256xf32>
    %cst_3 = arith.constant 1.000000e+00 : f32
    %cst_4 = arith.constant 0.000000e+00 : f32
    %4 = vector.broadcast %cst_3 : f32 to vector<4x256xf32>
    %5 = vector.broadcast %cst_4 : f32 to vector<4x256xf32>
    %6 = arith.select %3, %4, %5 : vector<4x256xi1>, vector<4x256xf32>
    %cst_5 = arith.constant 5.000000e-01 : f32
    %7 = vector.broadcast %cst_5 : f32 to vector<4x256xf32>
    %8 = arith.cmpf ogt, %1, %7 : vector<4x256xf32>
    %cst_6 = arith.constant 0.000000e+00 : f32
    %9 = vector.broadcast %cst_6 : f32 to vector<4x256xf32>
    %10 = arith.select %8, %6, %9 : vector<4x256xi1>, vector<4x256xf32>
    %cst_7 = arith.constant 5.000000e-01 : f32
    %11 = vector.broadcast %cst_7 : f32 to vector<4x256xf32>
    %12 = arith.cmpf ogt, %0, %11 : vector<4x256xf32>
    %cst_8 = arith.constant 1.000000e+00 : f32
    %cst_9 = arith.constant 0.000000e+00 : f32
    %13 = vector.broadcast %cst_8 : f32 to vector<4x256xf32>
    %14 = vector.broadcast %cst_9 : f32 to vector<4x256xf32>
    %15 = arith.select %12, %13, %14 : vector<4x256xi1>, vector<4x256xf32>
    %16 = arith.mulf %15, %6 : vector<4x256xf32>
    %17 = arith.mulf %10, %15 : vector<4x256xf32>
    %18 = arith.subf %0, %1 : vector<4x256xf32>
    %cst_10 = arith.constant 0.000000e+00 : f32
    %19 = vector.broadcast %cst_10 : f32 to vector<4x256xf32>
    %20 = arith.select %3, %18, %19 : vector<4x256xi1>, vector<4x256xf32>
    %cst_11 = arith.constant 1.000000e-07 : f32
    %cst_12 = arith.constant 0.99999988 : f32
    %21 = vector.broadcast %cst_11 : f32 to vector<4x256xf32>
    %22 = arith.maximumf %21, %0 : vector<4x256xf32>
    %23 = vector.broadcast %cst_12 : f32 to vector<4x256xf32>
    %24 = arith.minimumf %23, %22 : vector<4x256xf32>
    %cst_13 = arith.constant 5.000000e-01 : f32
    %25 = vector.broadcast %cst_13 : f32 to vector<4x256xf32>
    %26 = arith.cmpf ogt, %1, %25 : vector<4x256xf32>
    %cst_14 = arith.constant 1.000000e+00 : f32
    %27 = vector.broadcast %cst_14 : f32 to vector<4x256xf32>
    %28 = arith.subf %27, %24 : vector<4x256xf32>
    %29 = arith.select %26, %24, %28 : vector<4x256xi1>, vector<4x256xf32>
    %30 = math.log %29 : vector<4x256xf32>
    %cst_15 = arith.constant 0.000000e+00 : f32
    %31 = vector.broadcast %cst_15 : f32 to vector<4x256xf32>
    %32 = arith.subf %31, %30 : vector<4x256xf32>
    %cst_16 = arith.constant 0.000000e+00 : f32
    %33 = vector.broadcast %cst_16 : f32 to vector<4x256xf32>
    %34 = arith.select %3, %32, %33 : vector<4x256xi1>, vector<4x256xf32>
    %cst_17 = arith.constant dense<0.000000e+00> : vector<4xf32>
    %35 = vector.multi_reduction <add>, %17, %cst_17 [1] : vector<4x256xf32> to vector<4xf32>
    %36 = vector.shape_cast %35 : vector<4xf32> to vector<4x1xf32>
    %cst_18 = arith.constant dense<0.000000e+00> : vector<4xf32>
    %37 = vector.multi_reduction <add>, %16, %cst_18 [1] : vector<4x256xf32> to vector<4xf32>
    %38 = vector.shape_cast %37 : vector<4xf32> to vector<4x1xf32>
    %cst_19 = arith.constant dense<0.000000e+00> : vector<4xf32>
    %39 = vector.multi_reduction <add>, %6, %cst_19 [1] : vector<4x256xf32> to vector<4xf32>
    %40 = vector.shape_cast %39 : vector<4xf32> to vector<4x1xf32>
    %cst_20 = arith.constant dense<0.000000e+00> : vector<4xf32>
    %41 = vector.multi_reduction <add>, %10, %cst_20 [1] : vector<4x256xf32> to vector<4xf32>
    %42 = vector.shape_cast %41 : vector<4xf32> to vector<4x1xf32>
    %43 = math.absf %20 : vector<4x256xf32>
    %cst_21 = arith.constant dense<0.000000e+00> : vector<4xf32>
    %44 = vector.multi_reduction <add>, %43, %cst_21 [1] : vector<4x256xf32> to vector<4xf32>
    %45 = vector.shape_cast %44 : vector<4xf32> to vector<4x1xf32>
    %46 = arith.mulf %20, %20 : vector<4x256xf32>
    %cst_22 = arith.constant dense<0.000000e+00> : vector<4xf32>
    %47 = vector.multi_reduction <add>, %46, %cst_22 [1] : vector<4x256xf32> to vector<4xf32>
    %48 = vector.shape_cast %47 : vector<4xf32> to vector<4x1xf32>
    %cst_23 = arith.constant dense<0.000000e+00> : vector<4xf32>
    %49 = vector.multi_reduction <add>, %34, %cst_23 [1] : vector<4x256xf32> to vector<4xf32>
    %50 = vector.shape_cast %49 : vector<4xf32> to vector<4x1xf32>
    %cst_24 = arith.constant 0.000000e+00 : f32
    %51 = vector.broadcast %cst_24 : f32 to vector<4x1xf32>
    %52 = tpu.concatenate %36, %38, %40, %42, %45, %48, %50, %51 in 1 : vector<4x1xf32>, vector<4x1xf32>, vector<4x1xf32>, vector<4x1xf32>, vector<4x1xf32>, vector<4x1xf32>, vector<4x1xf32>, vector<4x1xf32> -> vector<4x8xf32>
    %c0_25 = arith.constant 0 : index
    %c0_26 = arith.constant 0 : index
    %53 = vector.load %arg4[%c0_25, %c0_26] : memref<4x8xf32, #tpu.memory_space<vmem>>, vector<4x8xf32>
    tpu.vector_store %arg4[%c0_25, %c0_26], %52 {strides = array<i32>} : memref<4x8xf32, #tpu.memory_space<vmem>>, vector<4x8xf32>,
    return
  }
  func.func @transform_0(%arg0: i32, %arg1: i32) -> (i32, i32) {
    %c0_i32 = arith.constant 0 : i32
    return %arg0, %arg1 : i32, i32
  }
  func.func @transform_1(%arg0: i32, %arg1: i32) -> (i32, i32) {
    %c0_i32 = arith.constant 0 : i32
    return %arg0, %arg1 : i32, i32
  }
  func.func @transform_2(%arg0: i32, %arg1: i32) -> (i32, i32) {
    %c0_i32 = arith.constant 0 : i32
    %c0_i32_0 = arith.constant 0 : i32
    return %arg0, %c0_i32 : i32, i32
  }
}

</mosaic_0001>

<llo_original>
// kernel: _per_scale_stats.1
$region0: #{_per_scale_stats.1}
  #allocation0 [shape = 'u32[]', space=smem, size = 0x4, offset = 0x4, fixed_abs, tag = 'smem constant byte address 0x4 - core index']
  #allocation1 [shape = 'u32[72,128]{1,0:T(1,128)}', space=vmem, size = 0x9000, scoped, tag = 'internal scratch']
  %s0 = inlined_call_operand.vmem [shape: f32[4,256], index: 0, kind: input, shape index: {}]
  %s1 = inlined_call_operand.vmem [shape: f32[4,256], index: 1, kind: input, shape index: {}]
  %s2 = inlined_call_operand.hbm [shape: f32[4,8], index: 2, kind: output, shape index: {}]
  %s3 = sld [smem:[#allocation0]]
  $region18: #{_per_scale_stats.1} parent=0
    _
  %s5 = ssub.s32 1, %s3
  %s6 = scalar_select 0, %s5, %s3
  $region1: #{_per_scale_stats.1} parent=0
    #allocation2 [shape = 'u8[2048]{0}', space=vmem, size = 0x800, scoped, tag = 'output window, operand 0, single buffered']
    #allocation3 [shape = 's32[1]{0}', space=sflag, size = 0x4, scoped, tag = 'scoped memory for _per_scale_stats.1']
    %7 = vsyncpa [#allocation3], 0
    // Predicated region
    $region2: #{_per_scale_stats.1} parent=1 // pred_check
      _
    $region3: #{_per_scale_stats.1} parent=1 // pred_check_branch
      %9 = sbr.rel (0) target = $region5
    $region4: #{_per_scale_stats.1} parent=1 // pred_region
      _
    $region5: #{_per_scale_stats.1} parent=1 // pred_fallthru
      _
    // Predicated region
    $region6: #{_per_scale_stats.1} parent=1 // pred_check
      _
    $region7: #{_per_scale_stats.1} parent=1 // pred_check_branch
      %11 = sbr.rel (0) target = $region9
    $region8: #{_per_scale_stats.1} parent=1 // pred_region
      _
    $region9: #{_per_scale_stats.1} parent=1 // pred_fallthru
      _
    %v12 = vld [vmem:[%s0] sm:$0xff]
    %v13 = vld [vmem:[%s1] sm:$0xff]
    %vm14 = vcmp.ne.f32.partialorder %v13, -1.0
    %v15 = vsel %vm14, 1.0, 0.0
    %vm16 = vcmp.gt.f32.partialorder %v13, 0.5
    %v17 = vsel %vm16, %v15, 0.0
    %vm18 = vcmp.gt.f32.partialorder %v12, 0.5
    %v19 = vsel %vm18, 1.0, 0.0
    %v20 = vmul.f32 %v19, %v15
    %v21 = vmul.f32 %v17, %v19
    %v22 = vsub.f32 %v12, %v13
    %v23 = vsel %vm14, %v22, 0.0
    %v24 = vmax.f32 %v12, 1e-07
    %v25 = vmin.f32 %v24, 0.9999999
    %v26 = vsub.f32 1.0, %v25
    %v27 = vsel %vm16, %v25, %v26
    %v28 = vlog2.pop %v27
    %v29 = vmul.f32 %v28, 0.6931472
    %v30 = vsub.f32 0.0, %v29
    %v31 = vsel %vm14, %v30, 0.0
    %33 = vst [vmem:[#allocation1] ss:$2 sm:$0xff] %v21
    %v34 = vld.sshfl [vmem:[#allocation1] sm:$0xff pattern:$0x75316420]
    %v35 = vld.sshfl [vmem:[#allocation1 + $0x8] sm:$0xff pattern:$0x75316420]
    %vm38 = vcmask 1043456
    %v39 = vsel %vm38, %v34, 0.0
    %v40 = vsel %vm38, %v35, 0.0
    %v41 = vadd.f32 %v39, %v40
    %42 = vadd.xlane.f32.xlu0 %v41
    %v43 = vpop.xlane.xlu0 %42
    %45 = vst [vmem:[#allocation1] ss:$2 sm:$0xff] %v20
    %v46 = vld.sshfl [vmem:[#allocation1] sm:$0xff pattern:$0x75316420]
    %v47 = vld.sshfl [vmem:[#allocation1 + $0x8] sm:$0xff pattern:$0x75316420]
    %v50 = vsel %vm38, %v46, 0.0
    %v51 = vsel %vm38, %v47, 0.0
    %v52 = vadd.f32 %v50, %v51
    %53 = vadd.xlane.f32.xlu0 %v52
    %v54 = vpop.xlane.xlu0 %53
    %56 = vst [vmem:[#allocation1] ss:$2 sm:$0xff] %v15
    %v57 = vld.sshfl [vmem:[#allocation1] sm:$0xff pattern:$0x75316420]
    %v58 = vld.sshfl [vmem:[#allocation1 + $0x8] sm:$0xff pattern:$0x75316420]
    %v61 = vsel %vm38, %v57, 0.0
    %v62 = vsel %vm38, %v58, 0.0
    %v63 = vadd.f32 %v61, %v62
    %64 = vadd.xlane.f32.xlu0 %v63
    %v65 = vpop.xlane.xlu0 %64
    %67 = vst [vmem:[#allocation1] ss:$2 sm:$0xff] %v17
    %v68 = vld.sshfl [vmem:[#allocation1] sm:$0xff pattern:$0x75316420]
    %v69 = vld.sshfl [vmem:[#allocation1 + $0x8] sm:$0xff pattern:$0x75316420]
    %v72 = vsel %vm38, %v68, 0.0
    %v73 = vsel %vm38, %v69, 0.0
    %v74 = vadd.f32 %v72, %v73
    %75 = vadd.xlane.f32.xlu0 %v74
    %v76 = vpop.xlane.xlu0 %75
    %v77 = vand.u32 2147483647, %v23
    %79 = vst [vmem:[#allocation1] ss:$2 sm:$0xff] %v77
    %v80 = vld.sshfl [vmem:[#allocation1] sm:$0xff pattern:$0x75316420]
    %v81 = vld.sshfl [vmem:[#allocation1 + $0x8] sm:$0xff pattern:$0x75316420]
    %v84 = vsel %vm38, %v80, 0.0
    %v85 = vsel %vm38, %v81, 0.0
    %v86 = vadd.f32 %v84, %v85
    %87 = vadd.xlane.f32.xlu0 %v86
    %v88 = vpop.xlane.xlu0 %87
    %v89 = vmul.f32 %v23, %v23
    %91 = vst [vmem:[#allocation1] ss:$2 sm:$0xff] %v89
    %v92 = vld.sshfl [vmem:[#allocation1] sm:$0xff pattern:$0x75316420]
    %v93 = vld.sshfl [vmem:[#allocation1 + $0x8] sm:$0xff pattern:$0x75316420]
    %v96 = vsel %vm38, %v92, 0.0
    %v97 = vsel %vm38, %v93, 0.0
    %v98 = vadd.f32 %v96, %v97
    %99 = vadd.xlane.f32.xlu0 %v98
    %v100 = vpop.xlane.xlu0 %99
    %102 = vst [vmem:[#allocation1] ss:$2 sm:$0xff] %v31
    %v103 = vld.sshfl [vmem:[#allocation1] sm:$0xff pattern:$0x75316420]
    %v104 = vld.sshfl [vmem:[#allocation1 + $0x8] sm:$0xff pattern:$0x75316420]
    %v107 = vsel %vm38, %v103, 0.0
    %v108 = vsel %vm38, %v104, 0.0
    %v109 = vadd.f32 %v107, %v108
    %110 = vadd.xlane.f32.xlu0 %v109
    %v111 = vpop.xlane.xlu0 %110
    %vm112 = vcmask 7168
    %v113 = vsel %vm112, %v43, %v54
    %vm114 = vcmask 15360
    %v115 = vsel %vm114, %v113, %v65
    %vm116 = vcmask 23552
    %v117 = vsel %vm116, %v115, %v76
    %vm118 = vcmask 31744
    %v119 = vsel %vm118, %v117, %v88
    %vm120 = vcmask 39936
    %v121 = vsel %vm120, %v119, %v100
    %vm122 = vcmask 48128
    %v123 = vsel %vm122, %v121, %v111
    %vm124 = vcmask 56320
    %v125 = vsel %vm124, %v123, 0.0
    %vm126 = vcmask 60416
    %127 = vst.msk [vmem:[#allocation2] sm:$0xf] %vm126, %v125
    // Predicated region
    $region10: #{_per_scale_stats.1} parent=1 // pred_check
      _
    $region11: #{_per_scale_stats.1} parent=1 // pred_check_branch
      %129 = sbr.rel (0) target = $region13
    $region12: #{_per_scale_stats.1} parent=1 // pred_region
      %131 = vsyncadd [#allocation3], 0
      %s133 = sshll.u32 [#allocation2], 4
      %s134 = int_to_ptr.vmem [resolvable:$true] %s133
      %s135 = sshll.u32 %s2, 4
      %s136 = int_to_ptr.hbm [resolvable:$true] %s135
      %138 = dma.vmem_to_hbm [thread:$0]  %s134, 64, %s136, [#allocation3]
    $region13: #{_per_scale_stats.1} parent=1 // pred_fallthru
      _
    // Predicated region
    $region14: #{_per_scale_stats.1} parent=1 // pred_check
      _
    $region15: #{_per_scale_stats.1} parent=1 // pred_check_branch
      %140 = sbr.rel (0) target = $region17
    $region16: #{_per_scale_stats.1} parent=1 // pred_region
      %142 = dma.done [#allocation3], 64
    $region17: #{_per_scale_stats.1} parent=1 // pred_fallthru
      _
    %143 = vsyncpa [#allocation3], 1

</llo_original>
